<compile_context>
chip_gen: v6e
topology: v6e:2x2x1
jax: 0.10.0
libtpu: 0.0.40
codegen_flags: <defaults>
</compile_context>

<pallas_src>
import functools

import jax
import jax.numpy as jnp
from jax.experimental import pallas as pl
from jax.experimental.pallas import tpu as pltpu


_ROW_ALIGN = 16        # bf16 sublane tile height (also covers the f32 (8,128) rule)
_LANE_ALIGN = 128      # lane width of a vreg tile
_MAX_TILE = 4096       # rows per grid step for large M


def _round_up(a, b):
    return ((a + b - 1) // b) * b


# ----------------------------- Pallas kernel --------------------------------
def _consec_kernel(x_ref, p_ref, o_ref, *, C, H1, H2, O1, O2, offs):
    HH = H1 + H2
    O12 = O1 + O2
    r_wf1, r_bf1, r_w1b, r_bout, r_w2ay, r_w2b = offs   # 16-row-aligned, static

    x = x_ref[...]                                      # (tm, C)      bf16
    wf1 = p_ref[r_wf1:r_wf1 + C, 0:HH]                  # (C, H1+H2)   [W1a_exp | W2a_x_exp]
    bf1 = p_ref[r_bf1:r_bf1 + 1, 0:HH]                  # (1, H1+H2)   [b1a | b2a]
    w1b_o = p_ref[r_w1b:r_w1b + H1, 0:O12]              # (H1, O1+O2)  [W1b | 0]
    b_out = p_ref[r_bout:r_bout + 1, 0:O12]             # (1, O1+O2)   [b1b | b2b]
    w2a_y = p_ref[r_w2ay:r_w2ay + O1, 0:H2]             # (O1, H2)     net1_out -> net2 hidden
    w2b_o = p_ref[r_w2b:r_w2b + H2, 0:O12]              # (H2, O1+O2)  [0 | W2b]

    # Fused first layers of both sub-nets (single MXU push over H1+H2 lanes).
    pre = jnp.dot(x, wf1, preferred_element_type=jnp.float32) + bf1      # (tm, HH) f32
    h1 = jnp.maximum(pre[:, :H1], 0.0)

    # y1_full's first O1 columns are exactly net1_out (w2b_o has zeros there),
    # so one matmul serves both the h2 input and the packed output.
    y1_full = jnp.dot(h1.astype(w1b_o.dtype), w1b_o,
                      preferred_element_type=jnp.float32) + b_out        # (tm, O12) f32
    y1 = y1_full[:, :O1]

    # net2 hidden: x-contribution already sits in `pre`, add the net1_out term.
    h2 = jnp.maximum(
        pre[:, H1:] + jnp.dot(y1.astype(w2a_y.dtype), w2a_y,
                              preferred_element_type=jnp.float32), 0.0)

    out = y1_full + jnp.dot(h2.astype(w2b_o.dtype), w2b_o,
                            preferred_element_type=jnp.float32)          # (tm, O1+O2)
    o_ref[...] = out.astype(o_ref.dtype)


def _choose_tile(M, tm=None, max_tile=_MAX_TILE):
    """Step-count-aware row tiling.

    * M <= max_tile : ONE grid step (per-step overhead ~0.35us would dominate;
      correct choice on single-TC v5e/v6e and the recommended fallback on v7x).
    * M  > max_tile : 4096-row steps -> >= 2 large steps for v7x megacore.
    Remainders are handled by padding to a multiple of the tile.
    """
    if tm is None:
        tm = M if M <= max_tile else max_tile
    tm = max(_ROW_ALIGN, _round_up(tm, _ROW_ALIGN))
    Mp = _round_up(M, tm)
    return tm, Mp


def _consec_pallas(x_flat, packed_params, offs, *, tm, C, H1, H2, O1, O2):
    Mp = x_flat.shape[0]
    R, WP = packed_params.shape
    O12 = O1 + O2
    assert Mp % tm == 0

    kernel = functools.partial(_consec_kernel, C=C, H1=H1, H2=H2,
                               O1=O1, O2=O2, offs=offs)

    grid_spec = pltpu.PrefetchScalarGridSpec(
        num_scalar_prefetch=0,
        grid=(Mp // tm,),
        in_specs=[
            pl.BlockSpec((tm, C), lambda i: (i, 0)),     # x rows, read once (bf16)
            pl.BlockSpec((R, WP), lambda i: (0, 0)),     # single packed weight slab
        ],
        out_specs=pl.BlockSpec((tm, O12), lambda i: (i, 0)),
    )

    return pl.pallas_call(
        kernel,
        out_shape=jax.ShapeDtypeStruct((Mp, O12), jnp.float32),
        grid_spec=grid_spec,
        compiler_params=pltpu.CompilerParams(
            dimension_semantics=("parallel",),
            vmem_limit_bytes=40 * 1024 * 1024,   # headroom for 4096-row tiles, < v7x 64 MiB
        ),
    )(x_flat, packed_params)


# ------------------------------ ConsecNet ------------------------------------
class ConsecNetPallas:
    """JAX/Pallas port of ConsecNet with two synthetic MLP sub-nets."""

    def __init__(self, in_features, net_input_indices, hidden1, out1, hidden2, out2,
                 last_out_only=False, seed=42, compute_dtype=jnp.bfloat16):
        assert len(net_input_indices) == 2
        self.in_features = in_features
        self.net_input_indices = [tuple(ix) for ix in net_input_indices]
        self.last_out_only = last_out_only
        self.h1, self.o1, self.h2, self.o2 = hidden1, out1, hidden2, out2
        self.compute_dtype = compute_dtype

        c1 = len(self.net_input_indices[0])
        c2 = len(self.net_input_indices[1])

        key = jax.random.PRNGKey(seed)
        ks = jax.random.split(key, 8)

        def lin(kw, kb, fan_in, fan_out):
            bound = 1.0 / jnp.sqrt(fan_in)
            w = jax.random.uniform(kw, (fan_in, fan_out), jnp.float32, -bound, bound)
            b = jax.random.uniform(kb, (1, fan_out), jnp.float32, -bound, bound)
            return w, b

        w1a, b1a = lin(ks[0], ks[1], c1, hidden1)
        w1b, b1b = lin(ks[2], ks[3], hidden1, out1)
        w2a, b2a = lin(ks[4], ks[5], c2 + out1, hidden2)   # net2 sees x[idx2] ++ net1_out
        w2b, b2b = lin(ks[6], ks[7], hidden2, out2)
        self.params = (w1a, b1a, w1b, b1b, w2a, b2a, w2b, b2b)

        # ---- pre-expand (static index routing) and pack all params in 1 slab ----
        C = in_features
        idx1 = jnp.asarray(self.net_input_indices[0], dtype=jnp.int32)
        idx2 = jnp.asarray(self.net_input_indices[1], dtype=jnp.int32)
        O12 = out1 + out2

        # Scatter first-layer rows to their source feature index (add handles dup idx).
        w1a_exp = jnp.zeros((C, hidden1), jnp.float32).at[idx1].add(w1a)
        w2a_x_exp = jnp.zeros((C, hidden2), jnp.float32).at[idx2].add(w2a[:c2])
        w2a_y = w2a[c2:]                                       # (out1, hidden2)

        wf1 = jnp.concatenate([w1a_exp, w2a_x_exp], axis=1)    # (C, H1+H2)
        bf1 = jnp.concatenate([b1a, b2a], axis=1)              # (1, H1+H2)
        w1b_out = jnp.zeros((hidden1, O12), jnp.float32).at[:, :out1].set(w1b)
        w2b_out = jnp.zeros((hidden2, O12), jnp.float32).at[:, out1:].set(w2b)
        b_out = jnp.concatenate([b1b, b2b], axis=1)            # (1, O1+O2)

        # Tile-aligned packing: every segment starts at a 16-row boundary and
        # the lane width is padded to 128, so in-kernel slices are free views.
        segs = [wf1, bf1, w1b_out, b_out, w2a_y, w2b_out]
        WP = _round_up(max(s.shape[1] for s in segs), _LANE_ALIGN)
        offs, cur = [], 0
        for s in segs:
            offs.append(cur)
            cur += _round_up(s.shape[0], _ROW_ALIGN)
        slab = jnp.zeros((cur, WP), jnp.float32)
        for s, o in zip(segs, offs):
            slab = slab.at[o:o + s.shape[0], :s.shape[1]].set(s)
        self.packed_params = slab.astype(compute_dtype)        # (R, 128) bf16
        self.param_offsets = tuple(int(o) for o in offs)

    def __call__(self, x, *, tm=None):
        # x: (B, N, C) float32
        B, N, C = x.shape
        assert C == self.in_features
        M = B * N
        x_flat = x.reshape(M, C).astype(self.compute_dtype)

        tm_eff, Mp = _choose_tile(M, tm)
        if Mp != M:
            x_flat = jnp.pad(x_flat, ((0, Mp - M), (0, 0)))

        out = _consec_pallas(x_flat, self.packed_params, self.param_offsets,
                             tm=tm_eff, C=C, H1=self.h1, H2=self.h2,
                             O1=self.o1, O2=self.o2)

        net1_out = out[:M, :self.o1].reshape(B, N, self.o1)
        net2_out = out[:M, self.o1:].reshape(B, N, self.o2)
        if self.last_out_only:
            return net2_out
        return net1_out, net2_out

    # plain-JAX f32 reference (original gather/concat formulation) for verification
    def reference(self, x):
        (w1a, b1a, w1b, b1b, w2a, b2a, w2b, b2b) = self.params
        idx1 = jnp.asarray(self.net_input_indices[0], dtype=jnp.int32)
        idx2 = jnp.asarray(self.net_input_indices[1], dtype=jnp.int32)
        x1 = jnp.take(x, idx1, axis=2)
        h1 = jnp.maximum(x1 @ w1a + b1a, 0.0)
        y1 = h1 @ w1b + b1b
        net2_in = jnp.concatenate([jnp.take(x, idx2, axis=2), y1], axis=2)
        h2 = jnp.maximum(net2_in @ w2a + b2a, 0.0)
        y2 = h2 @ w2b + b2b
        if self.last_out_only:
            return y2
        return y1, y2


# --------------------------------- main --------------------------------------
if __name__ == "__main__":
    B, N, C = 2, 64, 4          # x: (batch, points, features)  -> M = 128 rows
    HIDDEN1, OUT1 = 32, 8
    HIDDEN2, OUT2 = 32, 4
    ATOL = RTOL = 5e-2          # bf16 compute operands (f32 accumulation)

    model = ConsecNetPallas(
        in_features=C,
        net_input_indices=[[0, 1, 2], [1, 2, 3]],
        hidden1=HIDDEN1, out1=OUT1,
        hidden2=HIDDEN2, out2=OUT2,
        last_out_only=False,
    )

    x = jax.random.normal(jax.random.PRNGKey(0), (B, N, C), dtype=jnp.float32)

    net1_out, net2_out = model(x)
    jax.block_until_ready((net1_out, net2_out))

    ref1, ref2 = model.reference(x)
    assert net1_out.shape == (B, N, OUT1) and net2_out.shape == (B, N, OUT2)
    assert jnp.allclose(net1_out, ref1, atol=ATOL, rtol=RTOL)
    assert jnp.allclose(net2_out, ref2, atol=ATOL, rtol=RTOL)

    # Remainder path: B*N not a multiple of 16 (exercises row padding, 1 grid step).
    x_odd = jax.random.normal(jax.random.PRNGKey(1), (B, 50, C), dtype=jnp.float32)
    o1_odd, o2_odd = model(x_odd)
    jax.block_until_ready((o1_odd, o2_odd))
    r1_odd, r2_odd = model.reference(x_odd)
    assert jnp.allclose(o1_odd, r1_odd, atol=ATOL, rtol=RTOL)
    assert jnp.allclose(o2_odd, r2_odd, atol=ATOL, rtol=RTOL)

    # Multi-step path: M > 4096 rows (exercises the tiled grid + padding).
    x_big = jax.random.normal(jax.random.PRNGKey(2), (4, 1500, C), dtype=jnp.float32)
    o1_big, o2_big = model(x_big)
    jax.block_until_ready((o1_big, o2_big))
    r1_big, r2_big = model.reference(x_big)
    assert jnp.allclose(o1_big, r1_big, atol=ATOL, rtol=RTOL)
    assert jnp.allclose(o2_big, r2_big, atol=ATOL, rtol=RTOL)

    print("KERNEL_OK")
</pallas_src>

<mosaic_0001>
module attributes {stable_mosaic.version = 11 : i64} {
  func.func @_consec_kernel(%arg0: i32, %arg1: memref<128x4xbf16, #tpu.memory_space<vmem>>, %arg2: memref<128x128xbf16, #tpu.memory_space<vmem>>, %arg3: memref<128x12xf32, #tpu.memory_space<vmem>>) attributes {dimension_semantics = [#tpu.dimension_semantics<parallel>], iteration_bounds = array<i64: 1>, scalar_prefetch = 0 : i64, scratch_operands = 0 : i64, tpu.core_type = #tpu.core_type<tc>, window_params = [{transform_indices = @transform_0, window_bounds = array<i64: 128, 4>}, {pipeline_mode = #tpu.pipeline_mode<synchronous>, transform_indices = @transform_1, window_bounds = array<i64: 128, 128>}, {transform_indices = @transform_2, window_bounds = array<i64: 128, 12>}]} {
    %c0 = arith.constant 0 : index
    %c0_0 = arith.constant 0 : index
    %0 = vector.load %arg1[%c0, %c0_0] : memref<128x4xbf16, #tpu.memory_space<vmem>>, vector<128x4xbf16>
    %c0_1 = arith.constant 0 : index
    %c0_2 = arith.constant 0 : index
    %1 = vector.load %arg2[%c0_1, %c0_2] : memref<128x128xbf16, #tpu.memory_space<vmem>>, vector<4x64xbf16>
    %c16 = arith.constant 16 : index
    %c0_3 = arith.constant 0 : index
    %2 = vector.load %arg2[%c16, %c0_3] : memref<128x128xbf16, #tpu.memory_space<vmem>>, vector<1x64xbf16>
    %c32 = arith.constant 32 : index
    %c0_4 = arith.constant 0 : index
    %3 = vector.load %arg2[%c32, %c0_4] : memref<128x128xbf16, #tpu.memory_space<vmem>>, vector<32x12xbf16>
    %c64 = arith.constant 64 : index
    %c0_5 = arith.constant 0 : index
    %4 = vector.load %arg2[%c64, %c0_5] : memref<128x128xbf16, #tpu.memory_space<vmem>>, vector<1x12xbf16>
    %c80 = arith.constant 80 : index
    %c0_6 = arith.constant 0 : index
    %5 = vector.load %arg2[%c80, %c0_6] : memref<128x128xbf16, #tpu.memory_space<vmem>>, vector<8x32xbf16>
    %c96 = arith.constant 96 : index
    %c0_7 = arith.constant 0 : index
    %6 = vector.load %arg2[%c96, %c0_7] : memref<128x128xbf16, #tpu.memory_space<vmem>>, vector<32x12xbf16>
    %cst = arith.constant dense<0.000000e+00> : vector<128x64xf32>
    %7 = tpu.matmul %0, %1, %cst {dimension_numbers = #tpu.dot_dimension_numbers<[1], [0], [0], [1], [0, 0, 1, 1], [], []>} : vector<128x4xbf16>, vector<4x64xbf16>, vector<128x64xf32> -> vector<128x64xf32>
    %8 = arith.extf %2 : vector<1x64xbf16> to vector<1x64xf32>
    %9 = vector.broadcast %8 : vector<1x64xf32> to vector<128x64xf32>
    %10 = arith.addf %7, %9 : vector<128x64xf32>
    %11 = vector.extract_strided_slice %10 {offsets = [0, 0], sizes = [128, 32], strides = [1, 1]} : vector<128x64xf32> to vector<128x32xf32>
    %cst_8 = arith.constant 0.000000e+00 : f32
    %12 = vector.broadcast %cst_8 : f32 to vector<128x32xf32>
    %13 = arith.maximumf %11, %12 : vector<128x32xf32>
    %14 = arith.truncf %13 : vector<128x32xf32> to vector<128x32xbf16>
    %cst_9 = arith.constant dense<0.000000e+00> : vector<128x12xf32>
    %15 = tpu.matmul %14, %3, %cst_9 {dimension_numbers = #tpu.dot_dimension_numbers<[1], [0], [0], [1], [0, 0, 1, 1], [], []>} : vector<128x32xbf16>, vector<32x12xbf16>, vector<128x12xf32> -> vector<128x12xf32>
    %16 = arith.extf %4 : vector<1x12xbf16> to vector<1x12xf32>
    %17 = vector.broadcast %16 : vector<1x12xf32> to vector<128x12xf32>
    %18 = arith.addf %15, %17 : vector<128x12xf32>
    %19 = vector.extract_strided_slice %18 {offsets = [0, 0], sizes = [128, 8], strides = [1, 1]} : vector<128x12xf32> to vector<128x8xf32>
    %20 = vector.extract_strided_slice %10 {offsets = [0, 32], sizes = [128, 32], strides = [1, 1]} : vector<128x64xf32> to vector<128x32xf32>
    %21 = arith.truncf %19 : vector<128x8xf32> to vector<128x8xbf16>
    %cst_10 = arith.constant dense<0.000000e+00> : vector<128x32xf32>
    %22 = tpu.matmul %21, %5, %cst_10 {dimension_numbers = #tpu.dot_dimension_numbers<[1], [0], [0], [1], [0, 0, 1, 1], [], []>} : vector<128x8xbf16>, vector<8x32xbf16>, vector<128x32xf32> -> vector<128x32xf32>
    %23 = arith.addf %20, %22 : vector<128x32xf32>
    %cst_11 = arith.constant 0.000000e+00 : f32
    %24 = vector.broadcast %cst_11 : f32 to vector<128x32xf32>
    %25 = arith.maximumf %23, %24 : vector<128x32xf32>
    %26 = arith.truncf %25 : vector<128x32xf32> to vector<128x32xbf16>
    %cst_12 = arith.constant dense<0.000000e+00> : vector<128x12xf32>
    %27 = tpu.matmul %26, %6, %cst_12 {dimension_numbers = #tpu.dot_dimension_numbers<[1], [0], [0], [1], [0, 0, 1, 1], [], []>} : vector<128x32xbf16>, vector<32x12xbf16>, vector<128x12xf32> -> vector<128x12xf32>
    %28 = arith.addf %18, %27 : vector<128x12xf32>
    %c0_13 = arith.constant 0 : index
    %c0_14 = arith.constant 0 : index
    %29 = vector.load %arg3[%c0_13, %c0_14] : memref<128x12xf32, #tpu.memory_space<vmem>>, vector<128x12xf32>
    tpu.vector_store %arg3[%c0_13, %c0_14], %28 {strides = array<i32>} : memref<128x12xf32, #tpu.memory_space<vmem>>, vector<128x12xf32>,
    return
  }
  func.func @transform_0(%arg0: i32) -> (i32, i32) {
    %c0_i32 = arith.constant 0 : i32
    %c0_i32_0 = arith.constant 0 : i32
    return %arg0, %c0_i32 : i32, i32
  }
  func.func @transform_1(%arg0: i32) -> (i32, i32) {
    %c0_i32 = arith.constant 0 : i32
    %c0_i32_0 = arith.constant 0 : i32
    %c0_i32_1 = arith.constant 0 : i32
    return %c0_i32, %c0_i32_0 : i32, i32
  }
  func.func @transform_2(%arg0: i32) -> (i32, i32) {
    %c0_i32 = arith.constant 0 : i32
    %c0_i32_0 = arith.constant 0 : i32
    return %arg0, %c0_i32 : i32, i32
  }
}

</mosaic_0001>

<llo_original>
// kernel: tpu_custom_call.1
$region0: #{tpu_custom_call.1}
  #allocation0 [shape = 'u32[]', space=smem, size = 0x4, offset = 0x4, fixed_abs, tag = 'smem constant byte address 0x4 - core index']
  #allocation1 [shape = 'u32[144,128]{1,0:T(1,128)}', space=vmem, size = 0x12000, scoped, tag = 'internal scratch']
  %s0 = inlined_call_operand.vmem [shape: bf16[128,4], index: 0, kind: input, shape index: {}]
  %s1 = inlined_call_operand.vmem [shape: bf16[128,128], index: 1, kind: input, shape index: {}]
  %s2 = inlined_call_operand.vmem [shape: f32[128,12], index: 2, kind: output, shape index: {}]
  %s3 = sld [smem:[#allocation0]]
  $region18: #{tpu_custom_call.1} parent=0
    _
  %s5 = ssub.s32 1, %s3
  %s6 = scalar_select 0, %s5, %s3
  // Predicated region
  $region2: #{tpu_custom_call.1} parent=0 // pred_check
    _
  $region3: #{tpu_custom_call.1} parent=0 // pred_check_branch
    %8 = sbr.rel (0) target = $region5
  $region4: #{tpu_custom_call.1} parent=0 // pred_region
    _
  $region5: #{tpu_custom_call.1} parent=0 // pred_fallthru
    _
  // Predicated region
  $region6: #{tpu_custom_call.1} parent=0 // pred_check
    _
  $region7: #{tpu_custom_call.1} parent=0 // pred_check_branch
    %10 = sbr.rel (0) target = $region9
  $region8: #{tpu_custom_call.1} parent=0 // pred_region
    _
  $region9: #{tpu_custom_call.1} parent=0 // pred_fallthru
    _
  %v12 = vld [vmem:[%s0] sm:$0xf]
  %v13 = vld [vmem:[%s0 + $0x4] sm:$0xf]
  %v14 = vld [vmem:[%s0 + $0x8] sm:$0xf]
  %v15 = vld [vmem:[%s0 + $0xc] sm:$0xf]
  %v16 = vld [vmem:[%s0 + $0x10] sm:$0xf]
  %v17 = vld [vmem:[%s0 + $0x14] sm:$0xf]
  %v18 = vld [vmem:[%s0 + $0x18] sm:$0xf]
  %v19 = vld [vmem:[%s0 + $0x1c] sm:$0xf]
  %v20 = vld [vmem:[%s0 + $0x20] sm:$0xf]
  %v21 = vld [vmem:[%s0 + $0x24] sm:$0xf]
  %v22 = vld [vmem:[%s0 + $0x28] sm:$0xf]
  %v23 = vld [vmem:[%s0 + $0x2c] sm:$0xf]
  %v24 = vld [vmem:[%s0 + $0x30] sm:$0xf]
  %v25 = vld [vmem:[%s0 + $0x34] sm:$0xf]
  %v26 = vld [vmem:[%s0 + $0x38] sm:$0xf]
  %v27 = vld [vmem:[%s0 + $0x3c] sm:$0xf]
  %v28 = vld [vmem:[%s1] sm:$0x3]
  %v29 = vld [vmem:[%s1 + $0x8] sm:$0x1]
  %v30 = vld [vmem:[%s1 + $0x10] sm:$0xf]
  %v31 = vld [vmem:[%s1 + $0x14] sm:$0xf]
  %v32 = vld [vmem:[%s1 + $0x18] sm:$0xf]
  %v33 = vld [vmem:[%s1 + $0x1c] sm:$0xf]
  %v34 = vld [vmem:[%s1 + $0x20] sm:$0x1]
  %v35 = vld [vmem:[%s1 + $0x28] sm:$0xf]
  %v36 = vld [vmem:[%s1 + $0x30] sm:$0xf]
  %v37 = vld [vmem:[%s1 + $0x34] sm:$0xf]
  %v38 = vld [vmem:[%s1 + $0x38] sm:$0xf]
  %v39 = vld [vmem:[%s1 + $0x3c] sm:$0xf]
  %v40 = vunpack.c.l.bf16 %v29
  %v41 = vlaneseq
  %v42 = vshrl.u32 %v41, 7
  %v43 = vsub.s32 0, %v42
  %v44 = vrot.slane %v40, %v43
  %v61 = vunpack.c.l.b16 %v12
  %v62 = vunpack.c.l.b16 %v13
  %v63 = vunpack.c.l.b16 %v14
  %v64 = vunpack.c.l.b16 %v15
  %v65 = vunpack.c.l.b16 %v16
  %v66 = vunpack.c.l.b16 %v17
  %v67 = vunpack.c.l.b16 %v18
  %v68 = vunpack.c.l.b16 %v19
  %v69 = vunpack.c.l.b16 %v20
  %v70 = vunpack.c.l.b16 %v21
  %v71 = vunpack.c.l.b16 %v22
  %v72 = vunpack.c.l.b16 %v23
  %v73 = vunpack.c.l.b16 %v24
  %v74 = vunpack.c.l.b16 %v25
  %v75 = vunpack.c.l.b16 %v26
  %v76 = vunpack.c.l.b16 %v27
  %v77 = vpack.c.b16 %v62, %v61
  %v78 = vpack.c.b16 %v64, %v63
  %v79 = vpack.c.b16 %v66, %v65
  %v80 = vpack.c.b16 %v68, %v67
  %v81 = vpack.c.b16 %v70, %v69
  %v82 = vpack.c.b16 %v72, %v71
  %v83 = vpack.c.b16 %v74, %v73
  %v84 = vpack.c.b16 %v76, %v75
  %vm85 = vcmask 31744
  %v87 = vsel %vm85, %v77, 0
  %v90 = vsel %vm85, %v78, 0
  %v93 = vsel %vm85, %v79, 0
  %v96 = vsel %vm85, %v80, 0
  %v99 = vsel %vm85, %v81, 0
  %v102 = vsel %vm85, %v82, 0
  %v105 = vsel %vm85, %v83, 0
  %v108 = vsel %vm85, %v84, 0
  %vm110 = vcmask 1041408
  %v112 = vsel %vm110, %v28, 0
  %114 = vmatprep.subr.bf16.mxu0 0
  %115 = vmatpush1.bf16.msra.mxu0 0
  %116 = vmatprep.subr.bf16.mxu0 0
  %117 = vmatpush1.bf16.msra.mxu0 0
  %118 = vmatprep.subr.bf16.mxu0 0
  %119 = vmatpush1.bf16.msra.mxu0 0
  %120 = vmatprep.subr.bf16.mxu0 0
  %121 = vmatpush1.bf16.msra.mxu0 0
  %122 = vmatprep.subr.bf16.mxu0 0
  %123 = vmatpush1.bf16.msra.mxu0 0
  %124 = vmatprep.subr.bf16.mxu0 0
  %125 = vmatpush1.bf16.msra.mxu0 0
  %126 = vmatprep.subr.bf16.mxu0 0
  %127 = vmatpush1.bf16.msra.mxu0 0
  %128 = vmatprep.subr.bf16.mxu0 0
  %129 = vmatpush1.bf16.msra.mxu0 %v112
  %130 = vmatprep.subr.bf16.mxu0 0
  %131 = vmatpush2.bf16.msra.mxu0 0
  %132 = vmatprep.subr.bf16.mxu0 0
  %133 = vmatpush2.bf16.msra.mxu0 0
  %134 = vmatprep.subr.bf16.mxu0 0
  %135 = vmatpush2.bf16.msra.mxu0 0
  %136 = vmatprep.subr.bf16.mxu0 0
  %137 = vmatpush2.bf16.msra.mxu0 0
  %138 = vmatprep.subr.bf16.mxu0 0
  %139 = vmatpush2.bf16.msra.mxu0 0
  %140 = vmatprep.subr.bf16.mxu0 0
  %141 = vmatpush2.bf16.msra.mxu0 0
  %142 = vmatprep.subr.bf16.mxu0 0
  %143 = vmatpush2.bf16.msra.mxu0 0
  %144 = vmatprep.subr.bf16.mxu0 0
  %145 = vmatpush2.bf16.msra.mxu0 0
  %146 = vmatprep.mubr.bf16.mxu0 0
  %147 = vmatmul.mubr.bf16.gmra.mxu0 %v87
  %v148 = vpop.f32.mrf.mxu0
  %v149 = vadd.f32 %v44, %v148
  %v150 = vpop.f32.mrf.mxu0
  %v151 = vpop.f32.mrf.mxu0
  %v152 = vadd.f32 %v44, %v151
  %v153 = vpop.f32.mrf.mxu0
  %154 = vmatprep.mubr.bf16.mxu0 0
  %155 = vmatmul.mubr.bf16.gmra.mxu0 %v90
  %v156 = vpop.f32.mrf.mxu0
  %v157 = vadd.f32 %v44, %v156
  %v158 = vpop.f32.mrf.mxu0
  %v159 = vpop.f32.mrf.mxu0
  %v160 = vadd.f32 %v44, %v159
  %v161 = vpop.f32.mrf.mxu0
  %162 = vmatprep.mubr.bf16.mxu0 0
  %163 = vmatmul.mubr.bf16.gmra.mxu0 %v93
  %v164 = vpop.f32.mrf.mxu0
  %v165 = vadd.f32 %v44, %v164
  %v166 = vpop.f32.mrf.mxu0
  %v167 = vpop.f32.mrf.mxu0
  %v168 = vadd.f32 %v44, %v167
  %v169 = vpop.f32.mrf.mxu0
  %170 = vmatprep.mubr.bf16.mxu0 0
  %171 = vmatmul.mubr.bf16.gmra.mxu0 %v96
  %v172 = vpop.f32.mrf.mxu0
  %v173 = vadd.f32 %v44, %v172
  %v174 = vpop.f32.mrf.mxu0
  %v175 = vpop.f32.mrf.mxu0
  %v176 = vadd.f32 %v44, %v175
  %v177 = vpop.f32.mrf.mxu0
  %178 = vmatprep.mubr.bf16.mxu0 0
  %179 = vmatmul.mubr.bf16.gmra.mxu0 %v99
  %v180 = vpop.f32.mrf.mxu0
  %v181 = vadd.f32 %v44, %v180
  %v182 = vpop.f32.mrf.mxu0
  %v183 = vpop.f32.mrf.mxu0
  %v184 = vadd.f32 %v44, %v183
  %v185 = vpop.f32.mrf.mxu0
  %186 = vmatprep.mubr.bf16.mxu0 0
  %187 = vmatmul.mubr.bf16.gmra.mxu0 %v102
  %v188 = vpop.f32.mrf.mxu0
  %v189 = vadd.f32 %v44, %v188
  %v190 = vpop.f32.mrf.mxu0
  %v191 = vpop.f32.mrf.mxu0
  %v192 = vadd.f32 %v44, %v191
  %v193 = vpop.f32.mrf.mxu0
  %194 = vmatprep.mubr.bf16.mxu0 0
  %195 = vmatmul.mubr.bf16.gmra.mxu0 %v105
  %v196 = vpop.f32.mrf.mxu0
  %v197 = vadd.f32 %v44, %v196
  %v198 = vpop.f32.mrf.mxu0
  %v199 = vpop.f32.mrf.mxu0
  %v200 = vadd.f32 %v44, %v199
  %v201 = vpop.f32.mrf.mxu0
  %202 = vmatprep.mubr.bf16.mxu0 0
  %203 = vmatmul.mubr.bf16.gmra.mxu0 %v108
  %v204 = vpop.f32.mrf.mxu0
  %v205 = vadd.f32 %v44, %v204
  %v206 = vpop.f32.mrf.mxu0
  %v207 = vpop.f32.mrf.mxu0
  %v208 = vadd.f32 %v44, %v207
  %v209 = vpop.f32.mrf.mxu0
  %210 = vdwg.mxu0
  %v211 = vmax.f32 %v149, 0.0
  %v212 = vmax.f32 %v152, 0.0
  %v213 = vmax.f32 %v157, 0.0
  %v214 = vmax.f32 %v160, 0.0
  %v215 = vmax.f32 %v165, 0.0
  %v216 = vmax.f32 %v168, 0.0
  %v217 = vmax.f32 %v173, 0.0
  %v218 = vmax.f32 %v176, 0.0
  %v219 = vmax.f32 %v181, 0.0
  %v220 = vmax.f32 %v184, 0.0
  %v221 = vmax.f32 %v189, 0.0
  %v222 = vmax.f32 %v192, 0.0
  %v223 = vmax.f32 %v197, 0.0
  %v224 = vmax.f32 %v200, 0.0
  %v225 = vmax.f32 %v205, 0.0
  %v226 = vmax.f32 %v208, 0.0
  %v227 = vpack.c.bf16 %v212, %v211
  %v228 = vpack.c.bf16 %v214, %v213
  %v229 = vpack.c.bf16 %v216, %v215
  %v230 = vpack.c.bf16 %v218, %v217
  %v231 = vpack.c.bf16 %v220, %v219
  %v232 = vpack.c.bf16 %v222, %v221
  %v233 = vpack.c.bf16 %v224, %v223
  %v234 = vpack.c.bf16 %v226, %v225
  %v235 = vunpack.c.l.bf16 %v34
  %v236 = vlaneseq
  %v237 = vshrl.u32 %v236, 7
  %v238 = vsub.s32 0, %v237
  %v239 = vrot.slane %v235, %v238
  %v244 = vunpack.c.l.b16 %v30
  %v245 = vunpack.c.l.b16 %v31
  %v246 = vunpack.c.l.b16 %v32
  %v247 = vunpack.c.l.b16 %v33
  %v248 = vpack.c.b16 %v245, %v244
  %v249 = vpack.c.b16 %v247, %v246
  %vm252 = vcmask 261120
  %v254 = vsel %vm252, %v227, 0
  %v257 = vsel %vm252, %v228, 0
  %v260 = vsel %vm252, %v229, 0
  %v263 = vsel %vm252, %v230, 0
  %v266 = vsel %vm252, %v231, 0
  %v269 = vsel %vm252, %v232, 0
  %v272 = vsel %vm252, %v233, 0
  %v275 = vsel %vm252, %v234, 0
  %277 = vmatprep.subr.bf16.mxu0 0
  %278 = vmatpush1.bf16.msra.mxu0 0
  %279 = vmatprep.subr.bf16.mxu0 0
  %280 = vmatpush1.bf16.msra.mxu0 0
  %281 = vmatprep.subr.bf16.mxu0 0
  %282 = vmatpush1.bf16.msra.mxu0 0
  %283 = vmatprep.subr.bf16.mxu0 0
  %284 = vmatpush1.bf16.msra.mxu0 0
  %285 = vmatprep.subr.bf16.mxu0 0
  %286 = vmatpush1.bf16.msra.mxu0 0
  %287 = vmatprep.subr.bf16.mxu0 0
  %288 = vmatpush1.bf16.msra.mxu0 0
  %289 = vmatprep.subr.bf16.mxu0 0
  %290 = vmatpush1.bf16.msra.mxu0 %v249
  %291 = vmatprep.subr.bf16.mxu0 0
  %292 = vmatpush1.bf16.msra.mxu0 %v248
  %293 = vmatprep.subr.bf16.mxu0 0
  %294 = vmatpush2.bf16.msra.mxu0 0
  %295 = vmatprep.subr.bf16.mxu0 0
  %296 = vmatpush2.bf16.msra.mxu0 0
  %297 = vmatprep.subr.bf16.mxu0 0
  %298 = vmatpush2.bf16.msra.mxu0 0
  %299 = vmatprep.subr.bf16.mxu0 0
  %300 = vmatpush2.bf16.msra.mxu0 0
  %301 = vmatprep.subr.bf16.mxu0 0
  %302 = vmatpush2.bf16.msra.mxu0 0
  %303 = vmatprep.subr.bf16.mxu0 0
  %304 = vmatpush2.bf16.msra.mxu0 0
  %305 = vmatprep.subr.bf16.mxu0 0
  %306 = vmatpush2.bf16.msra.mxu0 0
  %307 = vmatprep.subr.bf16.mxu0 0
  %308 = vmatpush2.bf16.msra.mxu0 0
  %309 = vmatprep.mubr.bf16.mxu0 0
  %310 = vmatmul.mubr.bf16.gmra.mxu0 %v254
  %v311 = vpop.f32.mrf.mxu0
  %v312 = vadd.f32 %v239, %v311
  %v313 = vpop.f32.mrf.mxu0
  %v314 = vpop.f32.mrf.mxu0
  %v315 = vadd.f32 %v239, %v314
  %v316 = vpop.f32.mrf.mxu0
  %317 = vmatprep.mubr.bf16.mxu0 0
  %318 = vmatmul.mubr.bf16.gmra.mxu0 %v257
  %v319 = vpop.f32.mrf.mxu0
  %v320 = vadd.f32 %v239, %v319
  %v321 = vpop.f32.mrf.mxu0
  %v322 = vpop.f32.mrf.mxu0
  %v323 = vadd.f32 %v239, %v322
  %v324 = vpop.f32.mrf.mxu0
  %325 = vmatprep.mubr.bf16.mxu0 0
  %326 = vmatmul.mubr.bf16.gmra.mxu0 %v260
  %v327 = vpop.f32.mrf.mxu0
  %v328 = vadd.f32 %v239, %v327
  %v329 = vpop.f32.mrf.mxu0
  %v330 = vpop.f32.mrf.mxu0
  %v331 = vadd.f32 %v239, %v330
  %v332 = vpop.f32.mrf.mxu0
  %333 = vmatprep.mubr.bf16.mxu0 0
  %334 = vmatmul.mubr.bf16.gmra.mxu0 %v263
  %v335 = vpop.f32.mrf.mxu0
  %v336 = vadd.f32 %v239, %v335
  %v337 = vpop.f32.mrf.mxu0
  %v338 = vpop.f32.mrf.mxu0
  %v339 = vadd.f32 %v239, %v338
  %v340 = vpop.f32.mrf.mxu0
  %341 = vmatprep.mubr.bf16.mxu0 0
  %342 = vmatmul.mubr.bf16.gmra.mxu0 %v266
  %v343 = vpop.f32.mrf.mxu0
  %v344 = vadd.f32 %v239, %v343
  %v345 = vpop.f32.mrf.mxu0
  %v346 = vpop.f32.mrf.mxu0
  %v347 = vadd.f32 %v239, %v346
  %v348 = vpop.f32.mrf.mxu0
  %349 = vmatprep.mubr.bf16.mxu0 0
  %350 = vmatmul.mubr.bf16.gmra.mxu0 %v269
  %v351 = vpop.f32.mrf.mxu0
  %v352 = vadd.f32 %v239, %v351
  %v353 = vpop.f32.mrf.mxu0
  %v354 = vpop.f32.mrf.mxu0
  %v355 = vadd.f32 %v239, %v354
  %v356 = vpop.f32.mrf.mxu0
  %357 = vmatprep.mubr.bf16.mxu0 0
  %358 = vmatmul.mubr.bf16.gmra.mxu0 %v272
  %v359 = vpop.f32.mrf.mxu0
  %v360 = vadd.f32 %v239, %v359
  %v361 = vpop.f32.mrf.mxu0
  %v362 = vpop.f32.mrf.mxu0
  %v363 = vadd.f32 %v239, %v362
  %v364 = vpop.f32.mrf.mxu0
  %365 = vmatprep.mubr.bf16.mxu0 0
  %366 = vmatmul.mubr.bf16.gmra.mxu0 %v275
  %v367 = vpop.f32.mrf.mxu0
  %v368 = vadd.f32 %v239, %v367
  %v369 = vpop.f32.mrf.mxu0
  %v370 = vpop.f32.mrf.mxu0
  %v371 = vadd.f32 %v239, %v370
  %v372 = vpop.f32.mrf.mxu0
  %373 = vdwg.mxu0
  %v374 = vpack.c.bf16 %v315, %v312
  %v375 = vpack.c.bf16 %v323, %v320
  %v376 = vpack.c.bf16 %v331, %v328
  %v377 = vpack.c.bf16 %v339, %v336
  %v378 = vpack.c.bf16 %v347, %v344
  %v379 = vpack.c.bf16 %v355, %v352
  %v380 = vpack.c.bf16 %v363, %v360
  %v381 = vpack.c.bf16 %v371, %v368
  %vm382 = vcmask 64512
  %v384 = vsel %vm382, %v374, 0
  %v387 = vsel %vm382, %v375, 0
  %v390 = vsel %vm382, %v376, 0
  %v393 = vsel %vm382, %v377, 0
  %v396 = vsel %vm382, %v378, 0
  %v399 = vsel %vm382, %v379, 0
  %v402 = vsel %vm382, %v380, 0
  %v405 = vsel %vm382, %v381, 0
  %vm407 = vcmask 1043456
  %v409 = vsel %vm407, %v35, 0
  %411 = vmatprep.subr.bf16.mxu0 0
  %412 = vmatpush1.bf16.msra.mxu0 0
  %413 = vmatprep.subr.bf16.mxu0 0
  %414 = vmatpush1.bf16.msra.mxu0 0
  %415 = vmatprep.subr.bf16.mxu0 0
  %416 = vmatpush1.bf16.msra.mxu0 0
  %417 = vmatprep.subr.bf16.mxu0 0
  %418 = vmatpush1.bf16.msra.mxu0 0
  %419 = vmatprep.subr.bf16.mxu0 0
  %420 = vmatpush1.bf16.msra.mxu0 0
  %421 = vmatprep.subr.bf16.mxu0 0
  %422 = vmatpush1.bf16.msra.mxu0 0
  %423 = vmatprep.subr.bf16.mxu0 0
  %424 = vmatpush1.bf16.msra.mxu0 0
  %425 = vmatprep.subr.bf16.mxu0 0
  %426 = vmatpush1.bf16.msra.mxu0 %v409
  %427 = vmatprep.subr.bf16.mxu0 0
  %428 = vmatpush2.bf16.msra.mxu0 0
  %429 = vmatprep.subr.bf16.mxu0 0
  %430 = vmatpush2.bf16.msra.mxu0 0
  %431 = vmatprep.subr.bf16.mxu0 0
  %432 = vmatpush2.bf16.msra.mxu0 0
  %433 = vmatprep.subr.bf16.mxu0 0
  %434 = vmatpush2.bf16.msra.mxu0 0
  %435 = vmatprep.subr.bf16.mxu0 0
  %436 = vmatpush2.bf16.msra.mxu0 0
  %437 = vmatprep.subr.bf16.mxu0 0
  %438 = vmatpush2.bf16.msra.mxu0 0
  %439 = vmatprep.subr.bf16.mxu0 0
  %440 = vmatpush2.bf16.msra.mxu0 0
  %441 = vmatprep.subr.bf16.mxu0 0
  %442 = vmatpush2.bf16.msra.mxu0 0
  %443 = vmatprep.mubr.bf16.mxu0 0
  %444 = vmatmul.mubr.bf16.gmra.mxu0 %v384
  %v445 = vpop.f32.mrf.mxu0
  %v446 = vadd.f32 0.0, %v445
  %v447 = vpop.f32.mrf.mxu0
  %v448 = vpop.f32.mrf.mxu0
  %v449 = vadd.f32 0.0, %v448
  %v450 = vpop.f32.mrf.mxu0
  %451 = vmatprep.mubr.bf16.mxu0 0
  %452 = vmatmul.mubr.bf16.gmra.mxu0 %v387
  %v453 = vpop.f32.mrf.mxu0
  %v454 = vadd.f32 0.0, %v453
  %v455 = vpop.f32.mrf.mxu0
  %v456 = vpop.f32.mrf.mxu0
  %v457 = vadd.f32 0.0, %v456
  %v458 = vpop.f32.mrf.mxu0
  %459 = vmatprep.mubr.bf16.mxu0 0
  %460 = vmatmul.mubr.bf16.gmra.mxu0 %v390
  %v461 = vpop.f32.mrf.mxu0
  %v462 = vadd.f32 0.0, %v461
  %v463 = vpop.f32.mrf.mxu0
  %v464 = vpop.f32.mrf.mxu0
  %v465 = vadd.f32 0.0, %v464
  %v466 = vpop.f32.mrf.mxu0
  %467 = vmatprep.mubr.bf16.mxu0 0
  %468 = vmatmul.mubr.bf16.gmra.mxu0 %v393
  %v469 = vpop.f32.mrf.mxu0
  %v470 = vadd.f32 0.0, %v469
  %v471 = vpop.f32.mrf.mxu0
  %v472 = vpop.f32.mrf.mxu0
  %v473 = vadd.f32 0.0, %v472
  %v474 = vpop.f32.mrf.mxu0
  %475 = vmatprep.mubr.bf16.mxu0 0
  %476 = vmatmul.mubr.bf16.gmra.mxu0 %v396
  %v477 = vpop.f32.mrf.mxu0
  %v478 = vadd.f32 0.0, %v477
  %v479 = vpop.f32.mrf.mxu0
  %v480 = vpop.f32.mrf.mxu0
  %v481 = vadd.f32 0.0, %v480
  %v482 = vpop.f32.mrf.mxu0
  %483 = vmatprep.mubr.bf16.mxu0 0
  %484 = vmatmul.mubr.bf16.gmra.mxu0 %v399
  %v485 = vpop.f32.mrf.mxu0
  %v486 = vadd.f32 0.0, %v485
  %v487 = vpop.f32.mrf.mxu0
  %v488 = vpop.f32.mrf.mxu0
  %v489 = vadd.f32 0.0, %v488
  %v490 = vpop.f32.mrf.mxu0
  %491 = vmatprep.mubr.bf16.mxu0 0
  %492 = vmatmul.mubr.bf16.gmra.mxu0 %v402
  %v493 = vpop.f32.mrf.mxu0
  %v494 = vadd.f32 0.0, %v493
  %v495 = vpop.f32.mrf.mxu0
  %v496 = vpop.f32.mrf.mxu0
  %v497 = vadd.f32 0.0, %v496
  %v498 = vpop.f32.mrf.mxu0
  %499 = vmatprep.mubr.bf16.mxu0 0
  %500 = vmatmul.mubr.bf16.gmra.mxu0 %v405
  %v501 = vpop.f32.mrf.mxu0
  %v502 = vadd.f32 0.0, %v501
  %v503 = vpop.f32.mrf.mxu0
  %v504 = vpop.f32.mrf.mxu0
  %v505 = vadd.f32 0.0, %v504
  %v506 = vpop.f32.mrf.mxu0
  %507 = vdwg.mxu0
  %524 = vrot.lane.b32.xlu0 %v446, 32
  %v525 = vpop.permute.xlu0 %524
  %526 = vrot.lane.b32.xlu0 %v449, 32
  %v527 = vpop.permute.xlu0 %526
  %528 = vrot.lane.b32.xlu0 %v454, 32
  %v529 = vpop.permute.xlu0 %528
  %530 = vrot.lane.b32.xlu0 %v457, 32
  %v531 = vpop.permute.xlu0 %530
  %532 = vrot.lane.b32.xlu0 %v462, 32
  %v533 = vpop.permute.xlu0 %532
  %534 = vrot.lane.b32.xlu0 %v465, 32
  %v535 = vpop.permute.xlu0 %534
  %536 = vrot.lane.b32.xlu0 %v470, 32
  %v537 = vpop.permute.xlu0 %536
  %538 = vrot.lane.b32.xlu0 %v473, 32
  %v539 = vpop.permute.xlu0 %538
  %540 = vrot.lane.b32.xlu0 %v478, 32
  %v541 = vpop.permute.xlu0 %540
  %542 = vrot.lane.b32.xlu0 %v481, 32
  %v543 = vpop.permute.xlu0 %542
  %544 = vrot.lane.b32.xlu0 %v486, 32
  %v545 = vpop.permute.xlu0 %544
  %546 = vrot.lane.b32.xlu0 %v489, 32
  %v547 = vpop.permute.xlu0 %546
  %548 = vrot.lane.b32.xlu0 %v494, 32
  %v549 = vpop.permute.xlu0 %548
  %550 = vrot.lane.b32.xlu0 %v497, 32
  %v551 = vpop.permute.xlu0 %550
  %552 = vrot.lane.b32.xlu0 %v502, 32
  %v553 = vpop.permute.xlu0 %552
  %554 = vrot.lane.b32.xlu0 %v505, 32
  %v555 = vpop.permute.xlu0 %554
  %v572 = vadd.f32 %v149, %v525
  %v573 = vadd.f32 %v152, %v527
  %v574 = vadd.f32 %v157, %v529
  %v575 = vadd.f32 %v160, %v531
  %v576 = vadd.f32 %v165, %v533
  %v577 = vadd.f32 %v168, %v535
  %v578 = vadd.f32 %v173, %v537
  %v579 = vadd.f32 %v176, %v539
  %v580 = vadd.f32 %v181, %v541
  %v581 = vadd.f32 %v184, %v543
  %v582 = vadd.f32 %v189, %v545
  %v583 = vadd.f32 %v192, %v547
  %v584 = vadd.f32 %v197, %v549
  %v585 = vadd.f32 %v200, %v551
  %v586 = vadd.f32 %v205, %v553
  %v587 = vadd.f32 %v208, %v555
  %v588 = vmax.f32 %v572, 0.0
  %v589 = vmax.f32 %v573, 0.0
  %v590 = vmax.f32 %v574, 0.0
  %v591 = vmax.f32 %v575, 0.0
  %v592 = vmax.f32 %v576, 0.0
  %v593 = vmax.f32 %v577, 0.0
  %v594 = vmax.f32 %v578, 0.0
  %v595 = vmax.f32 %v579, 0.0
  %v596 = vmax.f32 %v580, 0.0
  %v597 = vmax.f32 %v581, 0.0
  %v598 = vmax.f32 %v582, 0.0
  %v599 = vmax.f32 %v583, 0.0
  %v600 = vmax.f32 %v584, 0.0
  %v601 = vmax.f32 %v585, 0.0
  %v602 = vmax.f32 %v586, 0.0
  %v603 = vmax.f32 %v587, 0.0
  %v604 = vpack.c.bf16 %v589, %v588
  %v605 = vpack.c.bf16 %v591, %v590
  %v606 = vpack.c.bf16 %v593, %v592
  %v607 = vpack.c.bf16 %v595, %v594
  %v608 = vpack.c.bf16 %v597, %v596
  %v609 = vpack.c.bf16 %v599, %v598
  %v610 = vpack.c.bf16 %v601, %v600
  %v611 = vpack.c.bf16 %v603, %v602
  %620 = vrot.lane.b32.xlu0 %v604, 96
  %v621 = vpop.permute.xlu0 %620
  %622 = vrot.lane.b32.xlu0 %v605, 96
  %v623 = vpop.permute.xlu0 %622
  %624 = vrot.lane.b32.xlu0 %v606, 96
  %v625 = vpop.permute.xlu0 %624
  %626 = vrot.lane.b32.xlu0 %v607, 96
  %v627 = vpop.permute.xlu0 %626
  %628 = vrot.lane.b32.xlu0 %v608, 96
  %v629 = vpop.permute.xlu0 %628
  %630 = vrot.lane.b32.xlu0 %v609, 96
  %v631 = vpop.permute.xlu0 %630
  %632 = vrot.lane.b32.xlu0 %v610, 96
  %v633 = vpop.permute.xlu0 %632
  %634 = vrot.lane.b32.xlu0 %v611, 96
  %v635 = vpop.permute.xlu0 %634
  %v640 = vunpack.c.l.b16 %v36
  %v641 = vunpack.c.l.b16 %v37
  %v642 = vunpack.c.l.b16 %v38
  %v643 = vunpack.c.l.b16 %v39
  %v644 = vpack.c.b16 %v641, %v640
  %v645 = vpack.c.b16 %v643, %v642
  %v649 = vsel %vm252, %v621, 0
  %v652 = vsel %vm252, %v623, 0
  %v655 = vsel %vm252, %v625, 0
  %v658 = vsel %vm252, %v627, 0
  %v661 = vsel %vm252, %v629, 0
  %v664 = vsel %vm252, %v631, 0
  %v667 = vsel %vm252, %v633, 0
  %v670 = vsel %vm252, %v635, 0
  %672 = vmatprep.subr.bf16.mxu0 0
  %673 = vmatpush1.bf16.msra.mxu0 0
  %674 = vmatprep.subr.bf16.mxu0 0
  %675 = vmatpush1.bf16.msra.mxu0 0
  %676 = vmatprep.subr.bf16.mxu0 0
  %677 = vmatpush1.bf16.msra.mxu0 0
  %678 = vmatprep.subr.bf16.mxu0 0
  %679 = vmatpush1.bf16.msra.mxu0 0
  %680 = vmatprep.subr.bf16.mxu0 0
  %681 = vmatpush1.bf16.msra.mxu0 0
  %682 = vmatprep.subr.bf16.mxu0 0
  %683 = vmatpush1.bf16.msra.mxu0 0
  %684 = vmatprep.subr.bf16.mxu0 0
  %685 = vmatpush1.bf16.msra.mxu0 %v645
  %686 = vmatprep.subr.bf16.mxu0 0
  %687 = vmatpush1.bf16.msra.mxu0 %v644
  %688 = vmatprep.subr.bf16.mxu0 0
  %689 = vmatpush2.bf16.msra.mxu0 0
  %690 = vmatprep.subr.bf16.mxu0 0
  %691 = vmatpush2.bf16.msra.mxu0 0
  %692 = vmatprep.subr.bf16.mxu0 0
  %693 = vmatpush2.bf16.msra.mxu0 0
  %694 = vmatprep.subr.bf16.mxu0 0
  %695 = vmatpush2.bf16.msra.mxu0 0
  %696 = vmatprep.subr.bf16.mxu0 0
  %697 = vmatpush2.bf16.msra.mxu0 0
  %698 = vmatprep.subr.bf16.mxu0 0
  %699 = vmatpush2.bf16.msra.mxu0 0
  %700 = vmatprep.subr.bf16.mxu0 0
  %701 = vmatpush2.bf16.msra.mxu0 0
  %702 = vmatprep.subr.bf16.mxu0 0
  %703 = vmatpush2.bf16.msra.mxu0 0
  %704 = vmatprep.mubr.bf16.mxu0 0
  %705 = vmatmul.mubr.bf16.gmra.mxu0 %v649
  %v706 = vpop.f32.mrf.mxu0
  %v707 = vadd.f32 0.0, %v706
  %v708 = vpop.f32.mrf.mxu0
  %v709 = vpop.f32.mrf.mxu0
  %v710 = vadd.f32 0.0, %v709
  %v711 = vpop.f32.mrf.mxu0
  %712 = vmatprep.mubr.bf16.mxu0 0
  %713 = vmatmul.mubr.bf16.gmra.mxu0 %v652
  %v714 = vpop.f32.mrf.mxu0
  %v715 = vadd.f32 0.0, %v714
  %v716 = vpop.f32.mrf.mxu0
  %v717 = vpop.f32.mrf.mxu0
  %v718 = vadd.f32 0.0, %v717
  %v719 = vpop.f32.mrf.mxu0
  %720 = vmatprep.mubr.bf16.mxu0 0
  %721 = vmatmul.mubr.bf16.gmra.mxu0 %v655
  %v722 = vpop.f32.mrf.mxu0
  %v723 = vadd.f32 0.0, %v722
  %v724 = vpop.f32.mrf.mxu0
  %v725 = vpop.f32.mrf.mxu0
  %v726 = vadd.f32 0.0, %v725
  %v727 = vpop.f32.mrf.mxu0
  %728 = vmatprep.mubr.bf16.mxu0 0
  %729 = vmatmul.mubr.bf16.gmra.mxu0 %v658
  %v730 = vpop.f32.mrf.mxu0
  %v731 = vadd.f32 0.0, %v730
  %v732 = vpop.f32.mrf.mxu0
  %v733 = vpop.f32.mrf.mxu0
  %v734 = vadd.f32 0.0, %v733
  %v735 = vpop.f32.mrf.mxu0
  %736 = vmatprep.mubr.bf16.mxu0 0
  %737 = vmatmul.mubr.bf16.gmra.mxu0 %v661
  %v738 = vpop.f32.mrf.mxu0
  %v739 = vadd.f32 0.0, %v738
  %v740 = vpop.f32.mrf.mxu0
  %v741 = vpop.f32.mrf.mxu0
  %v742 = vadd.f32 0.0, %v741
  %v743 = vpop.f32.mrf.mxu0
  %744 = vmatprep.mubr.bf16.mxu0 0
  %745 = vmatmul.mubr.bf16.gmra.mxu0 %v664
  %v746 = vpop.f32.mrf.mxu0
  %v747 = vadd.f32 0.0, %v746
  %v748 = vpop.f32.mrf.mxu0
  %v749 = vpop.f32.mrf.mxu0
  %v750 = vadd.f32 0.0, %v749
  %v751 = vpop.f32.mrf.mxu0
  %752 = vmatprep.mubr.bf16.mxu0 0
  %753 = vmatmul.mubr.bf16.gmra.mxu0 %v667
  %v754 = vpop.f32.mrf.mxu0
  %v755 = vadd.f32 0.0, %v754
  %v756 = vpop.f32.mrf.mxu0
  %v757 = vpop.f32.mrf.mxu0
  %v758 = vadd.f32 0.0, %v757
  %v759 = vpop.f32.mrf.mxu0
  %760 = vmatprep.mubr.bf16.mxu0 0
  %761 = vmatmul.mubr.bf16.gmra.mxu0 %v670
  %v762 = vpop.f32.mrf.mxu0
  %v763 = vadd.f32 0.0, %v762
  %v764 = vpop.f32.mrf.mxu0
  %v765 = vpop.f32.mrf.mxu0
  %v766 = vadd.f32 0.0, %v765
  %v767 = vpop.f32.mrf.mxu0
  %768 = vdwg.mxu0
  %v769 = vadd.f32 %v312, %v707
  %v770 = vadd.f32 %v315, %v710
  %v771 = vadd.f32 %v320, %v715
  %v772 = vadd.f32 %v323, %v718
  %v773 = vadd.f32 %v328, %v723
  %v774 = vadd.f32 %v331, %v726
  %v775 = vadd.f32 %v336, %v731
  %v776 = vadd.f32 %v339, %v734
  %v777 = vadd.f32 %v344, %v739
  %v778 = vadd.f32 %v347, %v742
  %v779 = vadd.f32 %v352, %v747
  %v780 = vadd.f32 %v355, %v750
  %v781 = vadd.f32 %v360, %v755
  %v782 = vadd.f32 %v363, %v758
  %v783 = vadd.f32 %v368, %v763
  %v784 = vadd.f32 %v371, %v766
  %vm785 = vcmask 97280
  %786 = vst.msk [vmem:[%s2] sm:$0xff] %vm785, %v769
  %787 = vst.msk [vmem:[%s2 + $0x8] sm:$0xff] %vm785, %v770
  %788 = vst.msk [vmem:[%s2 + $0x10] sm:$0xff] %vm785, %v771
  %789 = vst.msk [vmem:[%s2 + $0x18] sm:$0xff] %vm785, %v772
  %790 = vst.msk [vmem:[%s2 + $0x20] sm:$0xff] %vm785, %v773
  %791 = vst.msk [vmem:[%s2 + $0x28] sm:$0xff] %vm785, %v774
  %792 = vst.msk [vmem:[%s2 + $0x30] sm:$0xff] %vm785, %v775
  %793 = vst.msk [vmem:[%s2 + $0x38] sm:$0xff] %vm785, %v776
  %794 = vst.msk [vmem:[%s2 + $0x40] sm:$0xff] %vm785, %v777
  %795 = vst.msk [vmem:[%s2 + $0x48] sm:$0xff] %vm785, %v778
  %796 = vst.msk [vmem:[%s2 + $0x50] sm:$0xff] %vm785, %v779
  %797 = vst.msk [vmem:[%s2 + $0x58] sm:$0xff] %vm785, %v780
  %798 = vst.msk [vmem:[%s2 + $0x60] sm:$0xff] %vm785, %v781
  %799 = vst.msk [vmem:[%s2 + $0x68] sm:$0xff] %vm785, %v782
  %800 = vst.msk [vmem:[%s2 + $0x70] sm:$0xff] %vm785, %v783
  %801 = vst.msk [vmem:[%s2 + $0x78] sm:$0xff] %vm785, %v784
  // Predicated region
  $region10: #{tpu_custom_call.1} parent=0 // pred_check
    _
  $region11: #{tpu_custom_call.1} parent=0 // pred_check_branch
    %803 = sbr.rel (0) target = $region13
  $region12: #{tpu_custom_call.1} parent=0 // pred_region
    _
  $region13: #{tpu_custom_call.1} parent=0 // pred_fallthru
    _
  // Predicated region
  $region14: #{tpu_custom_call.1} parent=0 // pred_check
    _
  $region15: #{tpu_custom_call.1} parent=0 // pred_check_branch
    %805 = sbr.rel (0) target = $region17
  $region16: #{tpu_custom_call.1} parent=0 // pred_region
    _
  $region17: #{tpu_custom_call.1} parent=0 // pred_fallthru
    _

</llo_original>
